<compile_context>
chip_gen: v6e
topology: v6e:2x2x1
jax: 0.10.0
libtpu: 0.0.40
codegen_flags: <defaults>
</compile_context>

<pallas_src>
import jax
import jax.numpy as jnp
from jax.experimental import pallas as pl
from jax.experimental.pallas import tpu as pltpu

LANE = 128
MAX_TILE_B = 1024  # review: big tiles amortize the ~0.35us/step grid overhead


def _round_up(n, m):
    return ((n + m - 1) // m) * m


def _choose_tile_b(batch, max_tile=MAX_TILE_B):
    """Pick the batch tile (rows).

    * multiple of 16 (bf16 row packing: 16 rows per packed sublane group)
    * tiny batches (<=128 rows): a single grid step — splitting only adds
      per-step overhead, the second TC cannot win it back.
    * otherwise: an even number (>=2) of grid steps capped at max_tile rows so
      v7x's second TensorCore engages on the "parallel" batch axis.
    """
    rows = _round_up(max(batch, 1), 16)
    if rows <= 128:
        return rows
    n_steps = max(2, pl.cdiv(rows, max_tile))
    if n_steps % 2:
        n_steps += 1
    return _round_up(pl.cdiv(rows, n_steps), 16)


def qfunc_kernel(x_ref, w1_ref, w2_ref, w3_ref, b_ref, o_ref):
    """Fused 3-layer MLP on one batch tile; weights resident in VMEM.

    MXU inputs are bf16; accumulation / bias-add / ReLU stay f32 (v5e VPU has
    no bf16 path).
    """
    h1_w = w1_ref.shape[1]
    h2_w = w2_ref.shape[1]
    out_w = w3_ref.shape[1]

    x = x_ref[...].astype(jnp.bfloat16)                                  # (Bt, OBS)
    a1 = jnp.dot(x, w1_ref[...], preferred_element_type=jnp.float32)     # (Bt, H1)
    a1 = jnp.maximum(a1 + b_ref[0:1, :h1_w], 0.0).astype(jnp.bfloat16)
    a2 = jnp.dot(a1, w2_ref[...], preferred_element_type=jnp.float32)    # (Bt, H2)
    a2 = jnp.maximum(a2 + b_ref[1:2, :h2_w], 0.0).astype(jnp.bfloat16)
    a3 = jnp.dot(a2, w3_ref[...], preferred_element_type=jnp.float32)    # (Bt, ACT_PAD)
    o_ref[...] = (a3 + b_ref[2:3, :out_w]).astype(o_ref.dtype)           # full-lane vst


def qfunc_forward(x, params, *, action_space=4, tile_b=None, out_dtype=jnp.float32):
    """x: (B, obs) f32. Returns (B, action_space) f32 Q-values."""
    w1, w2, w3p, biases = params
    B, obs = x.shape
    h1, h2, act_pad = w1.shape[1], w2.shape[1], w3p.shape[1]

    if tile_b is None:
        tile_b = _choose_tile_b(B)
    padded_b = _round_up(B, tile_b)
    if padded_b != B:
        x = jnp.pad(x, ((0, padded_b - B), (0, 0)))
    grid = (padded_b // tile_b,)

    # Constant block index + single buffer: one HBM->VMEM DMA, VMEM-resident
    # across the whole grid, no wasted second pipeline buffer.
    def const(shape):
        return pl.BlockSpec(shape, lambda i: (0, 0), pipeline_mode=pl.Buffered(1))

    flops = 2 * padded_b * (obs * h1 + h1 * h2 + h2 * act_pad)
    weight_bytes = (w1.size + w2.size + w3p.size) * w1.dtype.itemsize + biases.size * 4
    io_bytes = padded_b * (obs * x.dtype.itemsize + act_pad * jnp.dtype(out_dtype).itemsize)
    cost = pl.CostEstimate(flops=flops, transcendentals=0,
                           bytes_accessed=weight_bytes + io_bytes)

    out = pl.pallas_call(
        qfunc_kernel,
        out_shape=jax.ShapeDtypeStruct((padded_b, act_pad), out_dtype),
        grid_spec=pltpu.PrefetchScalarGridSpec(
            num_scalar_prefetch=0,
            grid=grid,
            in_specs=[
                pl.BlockSpec((tile_b, obs), lambda i: (i, 0)),  # only x pipelines
                const(w1.shape),
                const(w2.shape),
                const(w3p.shape),
                const(biases.shape),
            ],
            out_specs=pl.BlockSpec((tile_b, act_pad), lambda i: (i, 0)),
        ),
        compiler_params=pltpu.CompilerParams(
            dimension_semantics=("parallel",),   # shard batch tiles across v7x TCs
            vmem_limit_bytes=32 * 1024 * 1024,   # headroom for large fused tiles on v5e
        ),
        cost_estimate=cost,
    )(x, w1, w2, w3p, biases)

    return out[:B, :action_space].astype(jnp.float32)


def init_params(key, observation_space=8, hidden_space_1=512, hidden_space_2=512,
                action_space=4):
    """torch.nn.Linear-style init (+/- 1/sqrt(fan_in)), packed for the kernel:
         w1: (obs, h1)       bf16
         w2: (h1, h2)        bf16
         w3: (h2, ACT_PAD)   bf16, zero-padded columns beyond action_space
         b : (3, max(h1,h2,ACT_PAD)) f32, rows = b1, b2, b3 (zero-padded)
    """
    ks = jax.random.split(key, 6)
    act_pad = _round_up(action_space, LANE)

    def lin(kw, kb, fan_in, fan_out):
        bound = 1.0 / jnp.sqrt(jnp.float32(fan_in))
        w = jax.random.uniform(kw, (fan_in, fan_out), jnp.float32, -bound, bound)
        b = jax.random.uniform(kb, (fan_out,), jnp.float32, -bound, bound)
        return w, b

    w1, b1 = lin(ks[0], ks[1], observation_space, hidden_space_1)
    w2, b2 = lin(ks[2], ks[3], hidden_space_1, hidden_space_2)
    w3, b3 = lin(ks[4], ks[5], hidden_space_2, action_space)

    w3p = jnp.zeros((hidden_space_2, act_pad), jnp.float32).at[:, :action_space].set(w3)

    bw = max(hidden_space_1, hidden_space_2, act_pad)
    biases = jnp.zeros((3, bw), jnp.float32)
    biases = biases.at[0, :hidden_space_1].set(b1)
    biases = biases.at[1, :hidden_space_2].set(b2)
    biases = biases.at[2, :action_space].set(b3)

    return (w1.astype(jnp.bfloat16), w2.astype(jnp.bfloat16),
            w3p.astype(jnp.bfloat16), biases)


def qfunc_reference(x, params, *, action_space=4):
    """Same math in plain XLA (bf16 weights/activations, f32 accumulation)."""
    w1, w2, w3p, b = params
    a1 = jnp.dot(x.astype(jnp.bfloat16), w1, preferred_element_type=jnp.float32)
    a1 = jnp.maximum(a1 + b[0, :w1.shape[1]], 0.0).astype(jnp.bfloat16)
    a2 = jnp.dot(a1, w2, preferred_element_type=jnp.float32)
    a2 = jnp.maximum(a2 + b[1, :w2.shape[1]], 0.0).astype(jnp.bfloat16)
    a3 = jnp.dot(a2, w3p, preferred_element_type=jnp.float32) + b[2, :w3p.shape[1]]
    return a3[:, :action_space]


if __name__ == "__main__":
    OBS, H1, H2, ACT = 8, 512, 512, 4

    key = jax.random.PRNGKey(0)
    k_param, k_x1, k_x2 = jax.random.split(key, 3)
    params = init_params(k_param, OBS, H1, H2, ACT)

    # Small batch (typical RL act(): single 16-row tile) and a larger batch that
    # exercises padding + a 2-step "parallel" batch grid (tile_b=160, grid=(2,)),
    # with weights VMEM-resident across both steps.
    for kx, batch in ((k_x1, 8), (k_x2, 300)):
        x = jax.random.normal(kx, (batch, OBS), jnp.float32)
        out = qfunc_forward(x, params, action_space=ACT)
        jax.block_until_ready(out)

        ref = qfunc_reference(x, params, action_space=ACT)
        assert out.shape == (batch, ACT), out.shape
        assert jnp.allclose(out, ref, atol=2e-2, rtol=2e-2), (
            float(jnp.max(jnp.abs(out - ref))))

    print("KERNEL_OK")
</pallas_src>

<mosaic_0001>
module attributes {stable_mosaic.version = 11 : i64} {
  func.func @qfunc_kernel(%arg0: i32, %arg1: memref<16x8xf32, #tpu.memory_space<vmem>>, %arg2: memref<8x512xbf16, #tpu.memory_space<vmem>>, %arg3: memref<512x512xbf16, #tpu.memory_space<vmem>>, %arg4: memref<512x128xbf16, #tpu.memory_space<vmem>>, %arg5: memref<3x512xf32, #tpu.memory_space<vmem>>, %arg6: memref<16x128xf32, #tpu.memory_space<vmem>>) attributes {dimension_semantics = [#tpu.dimension_semantics<parallel>], iteration_bounds = array<i64: 1>, scalar_prefetch = 0 : i64, scratch_operands = 0 : i64, tpu.core_type = #tpu.core_type<tc>, window_params = [{transform_indices = @transform_0, window_bounds = array<i64: 16, 8>}, {pipeline_mode = #tpu.pipeline_mode<synchronous>, transform_indices = @transform_1, window_bounds = array<i64: 8, 512>}, {pipeline_mode = #tpu.pipeline_mode<synchronous>, transform_indices = @transform_2, window_bounds = array<i64: 512, 512>}, {pipeline_mode = #tpu.pipeline_mode<synchronous>, transform_indices = @transform_3, window_bounds = array<i64: 512, 128>}, {pipeline_mode = #tpu.pipeline_mode<synchronous>, transform_indices = @transform_4, window_bounds = array<i64: 3, 512>}, {transform_indices = @transform_5, window_bounds = array<i64: 16, 128>}]} {
    %c0 = arith.constant 0 : index
    %c0_0 = arith.constant 0 : index
    %0 = vector.load %arg1[%c0, %c0_0] : memref<16x8xf32, #tpu.memory_space<vmem>>, vector<16x8xf32>
    %1 = arith.truncf %0 : vector<16x8xf32> to vector<16x8xbf16>
    %c0_1 = arith.constant 0 : index
    %c0_2 = arith.constant 0 : index
    %2 = vector.load %arg2[%c0_1, %c0_2] : memref<8x512xbf16, #tpu.memory_space<vmem>>, vector<8x512xbf16>
    %cst = arith.constant dense<0.000000e+00> : vector<16x512xf32>
    %3 = tpu.matmul %1, %2, %cst {dimension_numbers = #tpu.dot_dimension_numbers<[1], [0], [0], [1], [0, 0, 1, 1], [], []>} : vector<16x8xbf16>, vector<8x512xbf16>, vector<16x512xf32> -> vector<16x512xf32>
    %c0_3 = arith.constant 0 : index
    %c0_4 = arith.constant 0 : index
    %4 = vector.load %arg5[%c0_3, %c0_4] : memref<3x512xf32, #tpu.memory_space<vmem>>, vector<1x512xf32>
    %5 = vector.broadcast %4 : vector<1x512xf32> to vector<16x512xf32>
    %6 = arith.addf %3, %5 : vector<16x512xf32>
    %cst_5 = arith.constant 0.000000e+00 : f32
    %7 = vector.broadcast %cst_5 : f32 to vector<16x512xf32>
    %8 = arith.maximumf %6, %7 : vector<16x512xf32>
    %9 = arith.truncf %8 : vector<16x512xf32> to vector<16x512xbf16>
    %c0_6 = arith.constant 0 : index
    %c0_7 = arith.constant 0 : index
    %10 = vector.load %arg3[%c0_6, %c0_7] : memref<512x512xbf16, #tpu.memory_space<vmem>>, vector<512x512xbf16>
    %cst_8 = arith.constant dense<0.000000e+00> : vector<16x512xf32>
    %11 = tpu.matmul %9, %10, %cst_8 {dimension_numbers = #tpu.dot_dimension_numbers<[1], [0], [0], [1], [0, 0, 1, 1], [], []>} : vector<16x512xbf16>, vector<512x512xbf16>, vector<16x512xf32> -> vector<16x512xf32>
    %c1 = arith.constant 1 : index
    %c0_9 = arith.constant 0 : index
    %12 = vector.load %arg5[%c1, %c0_9] : memref<3x512xf32, #tpu.memory_space<vmem>>, vector<1x512xf32>
    %13 = vector.broadcast %12 : vector<1x512xf32> to vector<16x512xf32>
    %14 = arith.addf %11, %13 : vector<16x512xf32>
    %cst_10 = arith.constant 0.000000e+00 : f32
    %15 = vector.broadcast %cst_10 : f32 to vector<16x512xf32>
    %16 = arith.maximumf %14, %15 : vector<16x512xf32>
    %17 = arith.truncf %16 : vector<16x512xf32> to vector<16x512xbf16>
    %c0_11 = arith.constant 0 : index
    %c0_12 = arith.constant 0 : index
    %18 = vector.load %arg4[%c0_11, %c0_12] : memref<512x128xbf16, #tpu.memory_space<vmem>>, vector<512x128xbf16>
    %cst_13 = arith.constant dense<0.000000e+00> : vector<16x128xf32>
    %19 = tpu.matmul %17, %18, %cst_13 {dimension_numbers = #tpu.dot_dimension_numbers<[1], [0], [0], [1], [0, 0, 1, 1], [], []>} : vector<16x512xbf16>, vector<512x128xbf16>, vector<16x128xf32> -> vector<16x128xf32>
    %c2 = arith.constant 2 : index
    %c0_14 = arith.constant 0 : index
    %20 = vector.load %arg5[%c2, %c0_14] : memref<3x512xf32, #tpu.memory_space<vmem>>, vector<1x128xf32>
    %21 = vector.broadcast %20 : vector<1x128xf32> to vector<16x128xf32>
    %22 = arith.addf %19, %21 : vector<16x128xf32>
    %c0_15 = arith.constant 0 : index
    %c0_16 = arith.constant 0 : index
    %23 = vector.load %arg6[%c0_15, %c0_16] : memref<16x128xf32, #tpu.memory_space<vmem>>, vector<16x128xf32>
    tpu.vector_store %arg6[%c0_15, %c0_16], %22 {strides = array<i32>} : memref<16x128xf32, #tpu.memory_space<vmem>>, vector<16x128xf32>,
    return
  }
  func.func @transform_0(%arg0: i32) -> (i32, i32) {
    %c0_i32 = arith.constant 0 : i32
    %c0_i32_0 = arith.constant 0 : i32
    return %arg0, %c0_i32 : i32, i32
  }
  func.func @transform_1(%arg0: i32) -> (i32, i32) {
    %c0_i32 = arith.constant 0 : i32
    %c0_i32_0 = arith.constant 0 : i32
    %c0_i32_1 = arith.constant 0 : i32
    return %c0_i32, %c0_i32_0 : i32, i32
  }
  func.func @transform_2(%arg0: i32) -> (i32, i32) {
    %c0_i32 = arith.constant 0 : i32
    %c0_i32_0 = arith.constant 0 : i32
    %c0_i32_1 = arith.constant 0 : i32
    return %c0_i32, %c0_i32_0 : i32, i32
  }
  func.func @transform_3(%arg0: i32) -> (i32, i32) {
    %c0_i32 = arith.constant 0 : i32
    %c0_i32_0 = arith.constant 0 : i32
    %c0_i32_1 = arith.constant 0 : i32
    return %c0_i32, %c0_i32_0 : i32, i32
  }
  func.func @transform_4(%arg0: i32) -> (i32, i32) {
    %c0_i32 = arith.constant 0 : i32
    %c0_i32_0 = arith.constant 0 : i32
    %c0_i32_1 = arith.constant 0 : i32
    return %c0_i32, %c0_i32_0 : i32, i32
  }
  func.func @transform_5(%arg0: i32) -> (i32, i32) {
    %c0_i32 = arith.constant 0 : i32
    %c0_i32_0 = arith.constant 0 : i32
    return %arg0, %c0_i32 : i32, i32
  }
}

</mosaic_0001>

<llo_original>
// kernel: tpu_custom_call.1
$region0: #{tpu_custom_call.1}
  #allocation0 [shape = 'u32[]', space=smem, size = 0x4, offset = 0x4, fixed_abs, tag = 'smem constant byte address 0x4 - core index']
  #allocation1 [shape = 'u32[144,128]{1,0:T(1,128)}', space=vmem, size = 0x12000, scoped, tag = 'internal scratch']
  %s0 = inlined_call_operand.vmem [shape: f32[16,8], index: 0, kind: input, shape index: {}]
  %s1 = inlined_call_operand.vmem [shape: bf16[8,512], index: 1, kind: input, shape index: {}]
  %s2 = inlined_call_operand.hbm [shape: bf16[512,512], index: 2, kind: input, shape index: {}]
  %s3 = inlined_call_operand.hbm [shape: bf16[512,128], index: 3, kind: input, shape index: {}]
  %s4 = inlined_call_operand.hbm [shape: f32[3,512], index: 4, kind: input, shape index: {}]
  %s5 = inlined_call_operand.hbm [shape: f32[16,128], index: 5, kind: output, shape index: {}]
  %s6 = sld [smem:[#allocation0]]
  $region42: #{tpu_custom_call.1} parent=0
    _
  %s8 = ssub.s32 1, %s6
  %s9 = scalar_select 0, %s8, %s6
  $region1: #{tpu_custom_call.1} parent=0
    #allocation2 [shape = 'u8[524288]{0}', space=vmem, size = 0x80000, scoped, tag = 'input window, operand 2, single buffered']
    #allocation3 [shape = 's32[1]{0}', space=sflag, size = 0x4, scoped, tag = 'scoped memory for tpu_custom_call.1']
    #allocation4 [shape = 's32[1]{0}', space=sflag, size = 0x4, scoped, tag = 'scoped memory for tpu_custom_call.1']
    #allocation5 [shape = 'u8[131072]{0}', space=vmem, size = 0x20000, scoped, tag = 'input window, operand 3, single buffered']
    #allocation6 [shape = 's32[1]{0}', space=sflag, size = 0x4, scoped, tag = 'scoped memory for tpu_custom_call.1']
    #allocation7 [shape = 'u8[8192]{0}', space=vmem, size = 0x2000, scoped, tag = 'input window, operand 4, single buffered']
    #allocation8 [shape = 'u8[8192]{0}', space=vmem, size = 0x2000, scoped, tag = 'output window, operand 0, single buffered']
    %10 = vsyncpa [#allocation3], 0
    %11 = vsyncpa [#allocation6], 0
    %12 = vsyncpa [#allocation4], 0
    // Predicated region
    $region2: #{tpu_custom_call.1} parent=1 // pred_check
      _
    $region3: #{tpu_custom_call.1} parent=1 // pred_check_branch
      %14 = sbr.rel (0) target = $region5
    $region4: #{tpu_custom_call.1} parent=1 // pred_region
      _
    $region5: #{tpu_custom_call.1} parent=1 // pred_fallthru
      _
    // Predicated region
    $region6: #{tpu_custom_call.1} parent=1 // pred_check
      _
    $region7: #{tpu_custom_call.1} parent=1 // pred_check_branch
      %16 = sbr.rel (0) target = $region9
    $region8: #{tpu_custom_call.1} parent=1 // pred_region
      _
    $region9: #{tpu_custom_call.1} parent=1 // pred_fallthru
      _
    // Predicated region
    $region10: #{tpu_custom_call.1} parent=1 // pred_check
      _
    $region11: #{tpu_custom_call.1} parent=1 // pred_check_branch
      %18 = sbr.rel (0) target = $region13
    $region12: #{tpu_custom_call.1} parent=1 // pred_region
      %s20 = ssub.s32 16384, 16384
      %21 = vsyncadd [#allocation3], %s20
      %s22 = sshll.u32 [#allocation2], 4
      %s23 = int_to_ptr.vmem [resolvable:$true] %s22
      %28 = dma.hbm_to_vmem [thread:$0]  %s2, 16384, %s23, [#allocation3], 256, 256, 16
    $region13: #{tpu_custom_call.1} parent=1 // pred_fallthru
      _
    // Predicated region
    $region14: #{tpu_custom_call.1} parent=1 // pred_check
      _
    $region15: #{tpu_custom_call.1} parent=1 // pred_check_branch
      %30 = sbr.rel (0) target = $region17
    $region16: #{tpu_custom_call.1} parent=1 // pred_region
      %s32 = ssub.s32 4096, 4096
      %33 = vsyncadd [#allocation6], %s32
      %s34 = sshll.u32 [#allocation5], 4
      %s35 = int_to_ptr.vmem [resolvable:$true] %s34
      %40 = dma.hbm_to_vmem [thread:$0]  %s3, 4096, %s35, [#allocation6], 64, 64, 4
    $region17: #{tpu_custom_call.1} parent=1 // pred_fallthru
      _
    // Predicated region
    $region18: #{tpu_custom_call.1} parent=1 // pred_check
      _
    $region19: #{tpu_custom_call.1} parent=1 // pred_check_branch
      %42 = sbr.rel (0) target = $region21
    $region20: #{tpu_custom_call.1} parent=1 // pred_region
      %s44 = ssub.s32 256, 256
      %45 = vsyncadd [#allocation6], %s44
      %s47 = sshll.u32 [#allocation7], 4
      %s48 = int_to_ptr.vmem [resolvable:$true] %s47
      %50 = dma.hbm_to_vmem [thread:$0]  %s4, 256, %s48, [#allocation6]
    $region21: #{tpu_custom_call.1} parent=1 // pred_fallthru
      _
    // Predicated region
    $region22: #{tpu_custom_call.1} parent=1 // pred_check
      _
    $region23: #{tpu_custom_call.1} parent=1 // pred_check_branch
      %52 = sbr.rel (0) target = $region25
    $region24: #{tpu_custom_call.1} parent=1 // pred_region
      %53 = dma.done [#allocation3], 16384
    $region25: #{tpu_custom_call.1} parent=1 // pred_fallthru
      _
    // Predicated region
    $region26: #{tpu_custom_call.1} parent=1 // pred_check
      _
    $region27: #{tpu_custom_call.1} parent=1 // pred_check_branch
      %55 = sbr.rel (0) target = $region29
    $region28: #{tpu_custom_call.1} parent=1 // pred_region
      %56 = dma.done [#allocation6], 4096
    $region29: #{tpu_custom_call.1} parent=1 // pred_fallthru
      _
    // Predicated region
    $region30: #{tpu_custom_call.1} parent=1 // pred_check
      _
    $region31: #{tpu_custom_call.1} parent=1 // pred_check_branch
      %58 = sbr.rel (0) target = $region33
    $region32: #{tpu_custom_call.1} parent=1 // pred_region
      %59 = dma.done [#allocation6], 256
    $region33: #{tpu_custom_call.1} parent=1 // pred_fallthru
      _
    %v61 = vld [vmem:[%s0] sm:$0xff]
    %v62 = vld [vmem:[%s0 + $0x8] sm:$0xff]
    %v63 = vpack.c.bf16 %v62, %v61
    %v64 = vld [vmem:[%s1] sm:$0xff]
    %v65 = vld [vmem:[%s1 + $0x8] sm:$0xff]
    %v66 = vld [vmem:[#allocation7] ss:$4 sm:$0xf]
    %v68 = vlaneseq
    %v69 = vshrl.u32 %v68, 7
    %v70 = vsub.s32 0, %v69
    %v71 = vrot.slane %v66, %v70
    %v72 = vlaneseq
    %v73 = vshrl.u32 %v72, 7
    %v74 = vsub.s32 1, %v73
    %v75 = vrot.slane %v66, %v74
    %v76 = vlaneseq
    %v77 = vshrl.u32 %v76, 7
    %v78 = vsub.s32 2, %v77
    %v79 = vrot.slane %v66, %v78
    %v80 = vlaneseq
    %v81 = vshrl.u32 %v80, 7
    %v82 = vsub.s32 3, %v81
    %v83 = vrot.slane %v66, %v82
    %v90 = vunpack.c.l.b16 %v64
    %v91 = vunpack.c.h.b16 %v64
    %v92 = vunpack.c.l.b16 %v65
    %v93 = vunpack.c.h.b16 %v65
    %v94 = vpack.c.b16 %v90, %v90
    %v95 = vpack.c.b16 %v91, %v91
    %v96 = vpack.c.b16 %v92, %v92
    %v97 = vpack.c.b16 %v93, %v93
    %vm98 = vcmask 64512
    %v100 = vsel %vm98, %v63, 0
    %vm102 = vcmask 1043456
    %v104 = vsel %vm102, %v94, 0
    %v107 = vsel %vm102, %v95, 0
    %v110 = vsel %vm102, %v96, 0
    %v113 = vsel %vm102, %v97, 0
    %115 = vmatprep.subr.bf16.mxu0 0
    %116 = vmatpush1.bf16.msra.mxu0 0
    %117 = vmatprep.subr.bf16.mxu0 0
    %118 = vmatpush1.bf16.msra.mxu0 0
    %119 = vmatprep.subr.bf16.mxu0 0
    %120 = vmatpush1.bf16.msra.mxu0 0
    %121 = vmatprep.subr.bf16.mxu0 0
    %122 = vmatpush1.bf16.msra.mxu0 0
    %123 = vmatprep.subr.bf16.mxu0 0
    %124 = vmatpush1.bf16.msra.mxu0 0
    %125 = vmatprep.subr.bf16.mxu0 0
    %126 = vmatpush1.bf16.msra.mxu0 0
    %127 = vmatprep.subr.bf16.mxu0 0
    %128 = vmatpush1.bf16.msra.mxu0 0
    %129 = vmatprep.subr.bf16.mxu0 %v107
    %130 = vmatpush1.bf16.msra.mxu0 %v104
    %131 = vmatprep.subr.bf16.mxu0 0
    %132 = vmatpush2.bf16.msra.mxu0 0
    %133 = vmatprep.subr.bf16.mxu0 0
    %134 = vmatpush2.bf16.msra.mxu0 0
    %135 = vmatprep.subr.bf16.mxu0 0
    %136 = vmatpush2.bf16.msra.mxu0 0
    %137 = vmatprep.subr.bf16.mxu0 0
    %138 = vmatpush2.bf16.msra.mxu0 0
    %139 = vmatprep.subr.bf16.mxu0 0
    %140 = vmatpush2.bf16.msra.mxu0 0
    %141 = vmatprep.subr.bf16.mxu0 0
    %142 = vmatpush2.bf16.msra.mxu0 0
    %143 = vmatprep.subr.bf16.mxu0 0
    %144 = vmatpush2.bf16.msra.mxu0 0
    %145 = vmatprep.subr.bf16.mxu0 0
    %146 = vmatpush2.bf16.msra.mxu0 0
    %147 = vmatprep.mubr.bf16.mxu0 0
    %148 = vmatmul.mubr.bf16.gmra.mxu0 %v100
    %v149 = vpop.f32.mrf.mxu0
    %v150 = vadd.f32 %v71, %v149
    %v151 = vpop.f32.mrf.mxu0
    %v152 = vadd.f32 %v75, %v151
    %v153 = vpop.f32.mrf.mxu0
    %v154 = vadd.f32 %v71, %v153
    %v155 = vpop.f32.mrf.mxu0
    %v156 = vadd.f32 %v75, %v155
    %157 = vdwg.mxu0
    %158 = vmatprep.subr.bf16.mxu0 0
    %159 = vmatpush1.bf16.msra.mxu0 0
    %160 = vmatprep.subr.bf16.mxu0 0
    %161 = vmatpush1.bf16.msra.mxu0 0
    %162 = vmatprep.subr.bf16.mxu0 0
    %163 = vmatpush1.bf16.msra.mxu0 0
    %164 = vmatprep.subr.bf16.mxu0 0
    %165 = vmatpush1.bf16.msra.mxu0 0
    %166 = vmatprep.subr.bf16.mxu0 0
    %167 = vmatpush1.bf16.msra.mxu0 0
    %168 = vmatprep.subr.bf16.mxu0 0
    %169 = vmatpush1.bf16.msra.mxu0 0
    %170 = vmatprep.subr.bf16.mxu0 0
    %171 = vmatpush1.bf16.msra.mxu0 0
    %172 = vmatprep.subr.bf16.mxu0 %v113
    %173 = vmatpush1.bf16.msra.mxu0 %v110
    %174 = vmatprep.subr.bf16.mxu0 0
    %175 = vmatpush2.bf16.msra.mxu0 0
    %176 = vmatprep.subr.bf16.mxu0 0
    %177 = vmatpush2.bf16.msra.mxu0 0
    %178 = vmatprep.subr.bf16.mxu0 0
    %179 = vmatpush2.bf16.msra.mxu0 0
    %180 = vmatprep.subr.bf16.mxu0 0
    %181 = vmatpush2.bf16.msra.mxu0 0
    %182 = vmatprep.subr.bf16.mxu0 0
    %183 = vmatpush2.bf16.msra.mxu0 0
    %184 = vmatprep.subr.bf16.mxu0 0
    %185 = vmatpush2.bf16.msra.mxu0 0
    %186 = vmatprep.subr.bf16.mxu0 0
    %187 = vmatpush2.bf16.msra.mxu0 0
    %188 = vmatprep.subr.bf16.mxu0 0
    %189 = vmatpush2.bf16.msra.mxu0 0
    %190 = vmatprep.mubr.bf16.mxu0 0
    %191 = vmatmul.mubr.bf16.gmra.mxu0 %v100
    %v192 = vpop.f32.mrf.mxu0
    %v193 = vadd.f32 %v79, %v192
    %v194 = vpop.f32.mrf.mxu0
    %v195 = vadd.f32 %v83, %v194
    %v196 = vpop.f32.mrf.mxu0
    %v197 = vadd.f32 %v79, %v196
    %v198 = vpop.f32.mrf.mxu0
    %v199 = vadd.f32 %v83, %v198
    %200 = vdwg.mxu0
    %v201 = vmax.f32 %v150, 0.0
    %v202 = vmax.f32 %v152, 0.0
    %v203 = vmax.f32 %v193, 0.0
    %v204 = vmax.f32 %v195, 0.0
    %v205 = vmax.f32 %v154, 0.0
    %v206 = vmax.f32 %v156, 0.0
    %v207 = vmax.f32 %v197, 0.0
    %v208 = vmax.f32 %v199, 0.0
    %v209 = vpack.c.bf16 %v205, %v201
    %v210 = vpack.c.bf16 %v206, %v202
    %v211 = vpack.c.bf16 %v207, %v203
    %v212 = vpack.c.bf16 %v208, %v204
    %v213 = vld [vmem:[#allocation2] sm:$0xff]
    %v214 = vld [vmem:[#allocation2 + $0x8] sm:$0xff]
    %v215 = vld [vmem:[#allocation2 + $0x10] sm:$0xff]
    %v216 = vld [vmem:[#allocation2 + $0x18] sm:$0xff]
    %v217 = vld [vmem:[#allocation2 + $0x20] sm:$0xff]
    %v218 = vld [vmem:[#allocation2 + $0x28] sm:$0xff]
    %v219 = vld [vmem:[#allocation2 + $0x30] sm:$0xff]
    %v220 = vld [vmem:[#allocation2 + $0x38] sm:$0xff]
    %v221 = vld [vmem:[#allocation2 + $0x40] sm:$0xff]
    %v222 = vld [vmem:[#allocation2 + $0x48] sm:$0xff]
    %v223 = vld [vmem:[#allocation2 + $0x50] sm:$0xff]
    %v224 = vld [vmem:[#allocation2 + $0x58] sm:$0xff]
    %v225 = vld [vmem:[#allocation2 + $0x60] sm:$0xff]
    %v226 = vld [vmem:[#allocation2 + $0x68] sm:$0xff]
    %v227 = vld [vmem:[#allocation2 + $0x70] sm:$0xff]
    %v228 = vld [vmem:[#allocation2 + $0x78] sm:$0xff]
    %v229 = vld [vmem:[#allocation2 + $0x80] sm:$0xff]
    %v230 = vld [vmem:[#allocation2 + $0x88] sm:$0xff]
    %v231 = vld [vmem:[#allocation2 + $0x90] sm:$0xff]
    %v232 = vld [vmem:[#allocation2 + $0x98] sm:$0xff]
    %v233 = vld [vmem:[#allocation2 + $0xa0] sm:$0xff]
    %v234 = vld [vmem:[#allocation2 + $0xa8] sm:$0xff]
    %v235 = vld [vmem:[#allocation2 + $0xb0] sm:$0xff]
    %v236 = vld [vmem:[#allocation2 + $0xb8] sm:$0xff]
    %v237 = vld [vmem:[#allocation2 + $0xc0] sm:$0xff]
    %v238 = vld [vmem:[#allocation2 + $0xc8] sm:$0xff]
    %v239 = vld [vmem:[#allocation2 + $0xd0] sm:$0xff]
    %v240 = vld [vmem:[#allocation2 + $0xd8] sm:$0xff]
    %v241 = vld [vmem:[#allocation2 + $0xe0] sm:$0xff]
    %v242 = vld [vmem:[#allocation2 + $0xe8] sm:$0xff]
    %v243 = vld [vmem:[#allocation2 + $0xf0] sm:$0xff]
    %v244 = vld [vmem:[#allocation2 + $0xf8] sm:$0xff]
    %v245 = vld [vmem:[#allocation2 + $0x100] sm:$0xff]
    %v246 = vld [vmem:[#allocation2 + $0x108] sm:$0xff]
    %v247 = vld [vmem:[#allocation2 + $0x110] sm:$0xff]
    %v248 = vld [vmem:[#allocation2 + $0x118] sm:$0xff]
    %v249 = vld [vmem:[#allocation2 + $0x120] sm:$0xff]
    %v250 = vld [vmem:[#allocation2 + $0x128] sm:$0xff]
    %v251 = vld [vmem:[#allocation2 + $0x130] sm:$0xff]
    %v252 = vld [vmem:[#allocation2 + $0x138] sm:$0xff]
    %v253 = vld [vmem:[#allocation2 + $0x140] sm:$0xff]
    %v254 = vld [vmem:[#allocation2 + $0x148] sm:$0xff]
    %v255 = vld [vmem:[#allocation2 + $0x150] sm:$0xff]
    %v256 = vld [vmem:[#allocation2 + $0x158] sm:$0xff]
    %v257 = vld [vmem:[#allocation2 + $0x160] sm:$0xff]
    %v258 = vld [vmem:[#allocation2 + $0x168] sm:$0xff]
    %v259 = vld [vmem:[#allocation2 + $0x170] sm:$0xff]
    %v260 = vld [vmem:[#allocation2 + $0x178] sm:$0xff]
    %v261 = vld [vmem:[#allocation2 + $0x180] sm:$0xff]
    %v262 = vld [vmem:[#allocation2 + $0x188] sm:$0xff]
    %v263 = vld [vmem:[#allocation2 + $0x190] sm:$0xff]
    %v264 = vld [vmem:[#allocation2 + $0x198] sm:$0xff]
    %v265 = vld [vmem:[#allocation2 + $0x1a0] sm:$0xff]
    %v266 = vld [vmem:[#allocation2 + $0x1a8] sm:$0xff]
    %v267 = vld [vmem:[#allocation2 + $0x1b0] sm:$0xff]
    %v268 = vld [vmem:[#allocation2 + $0x1b8] sm:$0xff]
    %v269 = vld [vmem:[#allocation2 + $0x1c0] sm:$0xff]
    %v270 = vld [vmem:[#allocation2 + $0x1c8] sm:$0xff]
    %v271 = vld [vmem:[#allocation2 + $0x1d0] sm:$0xff]
    %v272 = vld [vmem:[#allocation2 + $0x1d8] sm:$0xff]
    %v273 = vld [vmem:[#allocation2 + $0x1e0] sm:$0xff]
    %v274 = vld [vmem:[#allocation2 + $0x1e8] sm:$0xff]
    %v275 = vld [vmem:[#allocation2 + $0x1f0] sm:$0xff]
    %v276 = vld [vmem:[#allocation2 + $0x1f8] sm:$0xff]
    %v277 = vld [vmem:[#allocation2 + $0x200] sm:$0xff]
    %v278 = vld [vmem:[#allocation2 + $0x208] sm:$0xff]
    %v279 = vld [vmem:[#allocation2 + $0x210] sm:$0xff]
    %v280 = vld [vmem:[#allocation2 + $0x218] sm:$0xff]
    %v281 = vld [vmem:[#allocation2 + $0x220] sm:$0xff]
    %v282 = vld [vmem:[#allocation2 + $0x228] sm:$0xff]
    %v283 = vld [vmem:[#allocation2 + $0x230] sm:$0xff]
    %v284 = vld [vmem:[#allocation2 + $0x238] sm:$0xff]
    %v285 = vld [vmem:[#allocation2 + $0x240] sm:$0xff]
    %v286 = vld [vmem:[#allocation2 + $0x248] sm:$0xff]
    %v287 = vld [vmem:[#allocation2 + $0x250] sm:$0xff]
    %v288 = vld [vmem:[#allocation2 + $0x258] sm:$0xff]
    %v289 = vld [vmem:[#allocation2 + $0x260] sm:$0xff]
    %v290 = vld [vmem:[#allocation2 + $0x268] sm:$0xff]
    %v291 = vld [vmem:[#allocation2 + $0x270] sm:$0xff]
    %v292 = vld [vmem:[#allocation2 + $0x278] sm:$0xff]
    %v293 = vld [vmem:[#allocation2 + $0x280] sm:$0xff]
    %v294 = vld [vmem:[#allocation2 + $0x288] sm:$0xff]
    %v295 = vld [vmem:[#allocation2 + $0x290] sm:$0xff]
    %v296 = vld [vmem:[#allocation2 + $0x298] sm:$0xff]
    %v297 = vld [vmem:[#allocation2 + $0x2a0] sm:$0xff]
    %v298 = vld [vmem:[#allocation2 + $0x2a8] sm:$0xff]
    %v299 = vld [vmem:[#allocation2 + $0x2b0] sm:$0xff]
    %v300 = vld [vmem:[#allocation2 + $0x2b8] sm:$0xff]
    %v301 = vld [vmem:[#allocation2 + $0x2c0] sm:$0xff]
    %v302 = vld [vmem:[#allocation2 + $0x2c8] sm:$0xff]
    %v303 = vld [vmem:[#allocation2 + $0x2d0] sm:$0xff]
    %v304 = vld [vmem:[#allocation2 + $0x2d8] sm:$0xff]
    %v305 = vld [vmem:[#allocation2 + $0x2e0] sm:$0xff]
    %v306 = vld [vmem:[#allocation2 + $0x2e8] sm:$0xff]
    %v307 = vld [vmem:[#allocation2 + $0x2f0] sm:$0xff]
    %v308 = vld [vmem:[#allocation2 + $0x2f8] sm:$0xff]
    %v309 = vld [vmem:[#allocation2 + $0x300] sm:$0xff]
    %v310 = vld [vmem:[#allocation2 + $0x308] sm:$0xff]
    %v311 = vld [vmem:[#allocation2 + $0x310] sm:$0xff]
    %v312 = vld [vmem:[#allocation2 + $0x318] sm:$0xff]
    %v313 = vld [vmem:[#allocation2 + $0x320] sm:$0xff]
    %v314 = vld [vmem:[#allocation2 + $0x328] sm:$0xff]
    %v315 = vld [vmem:[#allocation2 + $0x330] sm:$0xff]
    %v316 = vld [vmem:[#allocation2 + $0x338] sm:$0xff]
    %v317 = vld [vmem:[#allocation2 + $0x340] sm:$0xff]
    %v318 = vld [vmem:[#allocation2 + $0x348] sm:$0xff]
    %v319 = vld [vmem:[#allocation2 + $0x350] sm:$0xff]
    %v320 = vld [vmem:[#allocation2 + $0x358] sm:$0xff]
    %v321 = vld [vmem:[#allocation2 + $0x360] sm:$0xff]
    %v322 = vld [vmem:[#allocation2 + $0x368] sm:$0xff]
    %v323 = vld [vmem:[#allocation2 + $0x370] sm:$0xff]
    %v324 = vld [vmem:[#allocation2 + $0x378] sm:$0xff]
    %v325 = vld [vmem:[#allocation2 + $0x380] sm:$0xff]
    %v326 = vld [vmem:[#allocation2 + $0x388] sm:$0xff]
    %v327 = vld [vmem:[#allocation2 + $0x390] sm:$0xff]
    %v328 = vld [vmem:[#allocation2 + $0x398] sm:$0xff]
    %v329 = vld [vmem:[#allocation2 + $0x3a0] sm:$0xff]
    %v330 = vld [vmem:[#allocation2 + $0x3a8] sm:$0xff]
    %v331 = vld [vmem:[#allocation2 + $0x3b0] sm:$0xff]
    %v332 = vld [vmem:[#allocation2 + $0x3b8] sm:$0xff]
    %v333 = vld [vmem:[#allocation2 + $0x3c0] sm:$0xff]
    %v334 = vld [vmem:[#allocation2 + $0x3c8] sm:$0xff]
    %v335 = vld [vmem:[#allocation2 + $0x3d0] sm:$0xff]
    %v336 = vld [vmem:[#allocation2 + $0x3d8] sm:$0xff]
    %v337 = vld [vmem:[#allocation2 + $0x3e0] sm:$0xff]
    %v338 = vld [vmem:[#allocation2 + $0x3e8] sm:$0xff]
    %v339 = vld [vmem:[#allocation2 + $0x3f0] sm:$0xff]
    %v340 = vld [vmem:[#allocation2 + $0x3f8] sm:$0xff]
    %s341 = scalar_lea.vmem [#allocation7], 1
    %v342 = vld [vmem:[%s341] ss:$4 sm:$0xf]
    %v344 = vlaneseq
    %v345 = vshrl.u32 %v344, 7
    %v346 = vsub.s32 0, %v345
    %v347 = vrot.slane %v342, %v346
    %v348 = vlaneseq
    %v349 = vshrl.u32 %v348, 7
    %v350 = vsub.s32 1, %v349
    %v351 = vrot.slane %v342, %v350
    %v352 = vlaneseq
    %v353 = vshrl.u32 %v352, 7
    %v354 = vsub.s32 2, %v353
    %v355 = vrot.slane %v342, %v354
    %v356 = vlaneseq
    %v357 = vshrl.u32 %v356, 7
    %v358 = vsub.s32 3, %v357
    %v359 = vrot.slane %v342, %v358
    %v492 = vunpack.c.l.b16 %v213
    %v493 = vunpack.c.h.b16 %v213
    %v494 = vunpack.c.l.b16 %v214
    %v495 = vunpack.c.h.b16 %v214
    %v496 = vunpack.c.l.b16 %v215
    %v497 = vunpack.c.h.b16 %v215
    %v498 = vunpack.c.l.b16 %v216
    %v499 = vunpack.c.h.b16 %v216
    %v500 = vunpack.c.l.b16 %v217
    %v501 = vunpack.c.h.b16 %v217
    %v502 = vunpack.c.l.b16 %v218
    %v503 = vunpack.c.h.b16 %v218
    %v504 = vunpack.c.l.b16 %v219
    %v505 = vunpack.c.h.b16 %v219
    %v506 = vunpack.c.l.b16 %v220
    %v507 = vunpack.c.h.b16 %v220
    %v508 = vunpack.c.l.b16 %v221
    %v509 = vunpack.c.h.b16 %v221
    %v510 = vunpack.c.l.b16 %v222
    %v511 = vunpack.c.h.b16 %v222
    %v512 = vunpack.c.l.b16 %v223
    %v513 = vunpack.c.h.b16 %v223
    %v514 = vunpack.c.l.b16 %v224
    %v515 = vunpack.c.h.b16 %v224
    %v516 = vunpack.c.l.b16 %v225
    %v517 = vunpack.c.h.b16 %v225
    %v518 = vunpack.c.l.b16 %v226
    %v519 = vunpack.c.h.b16 %v226
    %v520 = vunpack.c.l.b16 %v227
    %v521 = vunpack.c.h.b16 %v227
    %v522 = vunpack.c.l.b16 %v228
    %v523 = vunpack.c.h.b16 %v228
    %v524 = vunpack.c.l.b16 %v229
    %v525 = vunpack.c.h.b16 %v229
    %v526 = vunpack.c.l.b16 %v230
    %v527 = vunpack.c.h.b16 %v230
    %v528 = vunpack.c.l.b16 %v231
    %v529 = vunpack.c.h.b16 %v231
    %v530 = vunpack.c.l.b16 %v232
    %v531 = vunpack.c.h.b16 %v232
    %v532 = vunpack.c.l.b16 %v233
    %v533 = vunpack.c.h.b16 %v233
    %v534 = vunpack.c.l.b16 %v234
    %v535 = vunpack.c.h.b16 %v234
    %v536 = vunpack.c.l.b16 %v235
    %v537 = vunpack.c.h.b16 %v235
    %v538 = vunpack.c.l.b16 %v236
    %v539 = vunpack.c.h.b16 %v236
    %v540 = vunpack.c.l.b16 %v237
    %v541 = vunpack.c.h.b16 %v237
    %v542 = vunpack.c.l.b16 %v238
    %v543 = vunpack.c.h.b16 %v238
    %v544 = vunpack.c.l.b16 %v239
    %v545 = vunpack.c.h.b16 %v239
    %v546 = vunpack.c.l.b16 %v240
    %v547 = vunpack.c.h.b16 %v240
    %v548 = vunpack.c.l.b16 %v241
    %v549 = vunpack.c.h.b16 %v241
    %v550 = vunpack.c.l.b16 %v242
    %v551 = vunpack.c.h.b16 %v242
    %v552 = vunpack.c.l.b16 %v243
    %v553 = vunpack.c.h.b16 %v243
    %v554 = vunpack.c.l.b16 %v244
    %v555 = vunpack.c.h.b16 %v244
    %v556 = vunpack.c.l.b16 %v245
    %v557 = vunpack.c.h.b16 %v245
    %v558 = vunpack.c.l.b16 %v246
    %v559 = vunpack.c.h.b16 %v246
    %v560 = vunpack.c.l.b16 %v247
    %v561 = vunpack.c.h.b16 %v247
    %v562 = vunpack.c.l.b16 %v248
    %v563 = vunpack.c.h.b16 %v248
    %v564 = vunpack.c.l.b16 %v249
    %v565 = vunpack.c.h.b16 %v249
    %v566 = vunpack.c.l.b16 %v250
    %v567 = vunpack.c.h.b16 %v250
    %v568 = vunpack.c.l.b16 %v251
    %v569 = vunpack.c.h.b16 %v251
    %v570 = vunpack.c.l.b16 %v252
    %v571 = vunpack.c.h.b16 %v252
    %v572 = vunpack.c.l.b16 %v253
    %v573 = vunpack.c.h.b16 %v253
    %v574 = vunpack.c.l.b16 %v254
    %v575 = vunpack.c.h.b16 %v254
    %v576 = vunpack.c.l.b16 %v255
    %v577 = vunpack.c.h.b16 %v255
    %v578 = vunpack.c.l.b16 %v256
    %v579 = vunpack.c.h.b16 %v256
    %v580 = vunpack.c.l.b16 %v257
    %v581 = vunpack.c.h.b16 %v257
    %v582 = vunpack.c.l.b16 %v258
    %v583 = vunpack.c.h.b16 %v258
    %v584 = vunpack.c.l.b16 %v259
    %v585 = vunpack.c.h.b16 %v259
    %v586 = vunpack.c.l.b16 %v260
    %v587 = vunpack.c.h.b16 %v260
    %v588 = vunpack.c.l.b16 %v261
    %v589 = vunpack.c.h.b16 %v261
    %v590 = vunpack.c.l.b16 %v262
    %v591 = vunpack.c.h.b16 %v262
    %v592 = vunpack.c.l.b16 %v263
    %v593 = vunpack.c.h.b16 %v263
    %v594 = vunpack.c.l.b16 %v264
    %v595 = vunpack.c.h.b16 %v264
    %v596 = vunpack.c.l.b16 %v265
    %v597 = vunpack.c.h.b16 %v265
    %v598 = vunpack.c.l.b16 %v266
    %v599 = vunpack.c.h.b16 %v266
    %v600 = vunpack.c.l.b16 %v267
    %v601 = vunpack.c.h.b16 %v267
    %v602 = vunpack.c.l.b16 %v268
    %v603 = vunpack.c.h.b16 %v268
    %v604 = vunpack.c.l.b16 %v269
    %v605 = vunpack.c.h.b16 %v269
    %v606 = vunpack.c.l.b16 %v270
    %v607 = vunpack.c.h.b16 %v270
    %v608 = vunpack.c.l.b16 %v271
    %v609 = vunpack.c.h.b16 %v271
    %v610 = vunpack.c.l.b16 %v272
    %v611 = vunpack.c.h.b16 %v272
    %v612 = vunpack.c.l.b16 %v273
    %v613 = vunpack.c.h.b16 %v273
    %v614 = vunpack.c.l.b16 %v274
    %v615 = vunpack.c.h.b16 %v274
    %v616 = vunpack.c.l.b16 %v275
    %v617 = vunpack.c.h.b16 %v275
    %v618 = vunpack.c.l.b16 %v276
    %v619 = vunpack.c.h.b16 %v276
    %v620 = vunpack.c.l.b16 %v277
    %v621 = vunpack.c.h.b16 %v277
    %v622 = vunpack.c.l.b16 %v278
    %v623 = vunpack.c.h.b16 %v278
    %v624 = vunpack.c.l.b16 %v279
    %v625 = vunpack.c.h.b16 %v279
    %v626 = vunpack.c.l.b16 %v280
    %v627 = vunpack.c.h.b16 %v280
    %v628 = vunpack.c.l.b16 %v281
    %v629 = vunpack.c.h.b16 %v281
    %v630 = vunpack.c.l.b16 %v282
    %v631 = vunpack.c.h.b16 %v282
    %v632 = vunpack.c.l.b16 %v283
    %v633 = vunpack.c.h.b16 %v283
    %v634 = vunpack.c.l.b16 %v284
    %v635 = vunpack.c.h.b16 %v284
    %v636 = vunpack.c.l.b16 %v285
    %v637 = vunpack.c.h.b16 %v285
    %v638 = vunpack.c.l.b16 %v286
    %v639 = vunpack.c.h.b16 %v286
    %v640 = vunpack.c.l.b16 %v287
    %v641 = vunpack.c.h.b16 %v287
    %v642 = vunpack.c.l.b16 %v288
    %v643 = vunpack.c.h.b16 %v288
    %v644 = vunpack.c.l.b16 %v289
    %v645 = vunpack.c.h.b16 %v289
    %v646 = vunpack.c.l.b16 %v290
    %v647 = vunpack.c.h.b16 %v290
    %v648 = vunpack.c.l.b16 %v291
    %v649 = vunpack.c.h.b16 %v291
    %v650 = vunpack.c.l.b16 %v292
    %v651 = vunpack.c.h.b16 %v292
    %v652 = vunpack.c.l.b16 %v293
    %v653 = vunpack.c.h.b16 %v293
    %v654 = vunpack.c.l.b16 %v294
    %v655 = vunpack.c.h.b16 %v294
    %v656 = vunpack.c.l.b16 %v295
    %v657 = vunpack.c.h.b16 %v295
    %v658 = vunpack.c.l.b16 %v296
    %v659 = vunpack.c.h.b16 %v296
    %v660 = vunpack.c.l.b16 %v297
    %v661 = vunpack.c.h.b16 %v297
    %v662 = vunpack.c.l.b16 %v298
    %v663 = vunpack.c.h.b16 %v298
    %v664 = vunpack.c.l.b16 %v299
    %v665 = vunpack.c.h.b16 %v299
    %v666 = vunpack.c.l.b16 %v300
    %v667 = vunpack.c.h.b16 %v300
    %v668 = vunpack.c.l.b16 %v301
    %v669 = vunpack.c.h.b16 %v301
    %v670 = vunpack.c.l.b16 %v302
    %v671 = vunpack.c.h.b16 %v302
    %v672 = vunpack.c.l.b16 %v303
    %v673 = vunpack.c.h.b16 %v303
    %v674 = vunpack.c.l.b16 %v304
    %v675 = vunpack.c.h.b16 %v304
    %v676 = vunpack.c.l.b16 %v305
    %v677 = vunpack.c.h.b16 %v305
    %v678 = vunpack.c.l.b16 %v306
    %v679 = vunpack.c.h.b16 %v306
    %v680 = vunpack.c.l.b16 %v307
    %v681 = vunpack.c.h.b16 %v307
    %v682 = vunpack.c.l.b16 %v308
    %v683 = vunpack.c.h.b16 %v308
    %v684 = vunpack.c.l.b16 %v309
    %v685 = vunpack.c.h.b16 %v309
    %v686 = vunpack.c.l.b16 %v310
    %v687 = vunpack.c.h.b16 %v310
    %v688 = vunpack.c.l.b16 %v311
    %v689 = vunpack.c.h.b16 %v311
    %v690 = vunpack.c.l.b16 %v312
    %v691 = vunpack.c.h.b16 %v312
    %v692 = vunpack.c.l.b16 %v313
    %v693 = vunpack.c.h.b16 %v313
    %v694 = vunpack.c.l.b16 %v314
    %v695 = vunpack.c.h.b16 %v314
    %v696 = vunpack.c.l.b16 %v315
    %v697 = vunpack.c.h.b16 %v315
    %v698 = vunpack.c.l.b16 %v316
    %v699 = vunpack.c.h.b16 %v316
    %v700 = vunpack.c.l.b16 %v317
    %v701 = vunpack.c.h.b16 %v317
    %v702 = vunpack.c.l.b16 %v318
    %v703 = vunpack.c.h.b16 %v318
    %v704 = vunpack.c.l.b16 %v319
    %v705 = vunpack.c.h.b16 %v319
    %v706 = vunpack.c.l.b16 %v320
    %v707 = vunpack.c.h.b16 %v320
    %v708 = vunpack.c.l.b16 %v321
    %v709 = vunpack.c.h.b16 %v321
    %v710 = vunpack.c.l.b16 %v322
    %v711 = vunpack.c.h.b16 %v322
    %v712 = vunpack.c.l.b16 %v323
    %v713 = vunpack.c.h.b16 %v323
    %v714 = vunpack.c.l.b16 %v324
    %v715 = vunpack.c.h.b16 %v324
    %v716 = vunpack.c.l.b16 %v325
    %v717 = vunpack.c.h.b16 %v325
    %v718 = vunpack.c.l.b16 %v326
    %v719 = vunpack.c.h.b16 %v326
    %v720 = vunpack.c.l.b16 %v327
    %v721 = vunpack.c.h.b16 %v327
    %v722 = vunpack.c.l.b16 %v328
    %v723 = vunpack.c.h.b16 %v328
    %v724 = vunpack.c.l.b16 %v329
    %v725 = vunpack.c.h.b16 %v329
    %v726 = vunpack.c.l.b16 %v330
    %v727 = vunpack.c.h.b16 %v330
    %v728 = vunpack.c.l.b16 %v331
    %v729 = vunpack.c.h.b16 %v331
    %v730 = vunpack.c.l.b16 %v332
    %v731 = vunpack.c.h.b16 %v332
    %v732 = vunpack.c.l.b16 %v333
    %v733 = vunpack.c.h.b16 %v333
    %v734 = vunpack.c.l.b16 %v334
    %v735 = vunpack.c.h.b16 %v334
    %v736 = vunpack.c.l.b16 %v335
    %v737 = vunpack.c.h.b16 %v335
    %v738 = vunpack.c.l.b16 %v336
    %v739 = vunpack.c.h.b16 %v336
    %v740 = vunpack.c.l.b16 %v337
    %v741 = vunpack.c.h.b16 %v337
    %v742 = vunpack.c.l.b16 %v338
    %v743 = vunpack.c.h.b16 %v338
    %v744 = vunpack.c.l.b16 %v339
    %v745 = vunpack.c.h.b16 %v339
    %v746 = vunpack.c.l.b16 %v340
    %v747 = vunpack.c.h.b16 %v340
    %v748 = vpack.c.b16 %v496, %v492
    %v749 = vpack.c.b16 %v497, %v493
    %v750 = vpack.c.b16 %v498, %v494
    %v751 = vpack.c.b16 %v499, %v495
    %v752 = vpack.c.b16 %v504, %v500
    %v753 = vpack.c.b16 %v505, %v501
    %v754 = vpack.c.b16 %v506, %v502
    %v755 = vpack.c.b16 %v507, %v503
    %v756 = vpack.c.b16 %v512, %v508
    %v757 = vpack.c.b16 %v513, %v509
    %v758 = vpack.c.b16 %v514, %v510
    %v759 = vpack.c.b16 %v515, %v511
    %v760 = vpack.c.b16 %v520, %v516
    %v761 = vpack.c.b16 %v521, %v517
    %v762 = vpack.c.b16 %v522, %v518
    %v763 = vpack.c.b16 %v523, %v519
    %v764 = vpack.c.b16 %v528, %v524
    %v765 = vpack.c.b16 %v529, %v525
    %v766 = vpack.c.b16 %v530, %v526
    %v767 = vpack.c.b16 %v531, %v527
    %v768 = vpack.c.b16 %v536, %v532
    %v769 = vpack.c.b16 %v537, %v533
    %v770 = vpack.c.b16 %v538, %v534
    %v771 = vpack.c.b16 %v539, %v535
    %v772 = vpack.c.b16 %v544, %v540
    %v773 = vpack.c.b16 %v545, %v541
    %v774 = vpack.c.b16 %v546, %v542
    %v775 = vpack.c.b16 %v547, %v543
    %v776 = vpack.c.b16 %v552, %v548
    %v777 = vpack.c.b16 %v553, %v549
    %v778 = vpack.c.b16 %v554, %v550
    %v779 = vpack.c.b16 %v555, %v551
    %v780 = vpack.c.b16 %v560, %v556
    %v781 = vpack.c.b16 %v561, %v557
    %v782 = vpack.c.b16 %v562, %v558
    %v783 = vpack.c.b16 %v563, %v559
    %v784 = vpack.c.b16 %v568, %v564
    %v785 = vpack.c.b16 %v569, %v565
    %v786 = vpack.c.b16 %v570, %v566
    %v787 = vpack.c.b16 %v571, %v567
    %v788 = vpack.c.b16 %v576, %v572
    %v789 = vpack.c.b16 %v577, %v573
    %v790 = vpack.c.b16 %v578, %v574
    %v791 = vpack.c.b16 %v579, %v575
    %v792 = vpack.c.b16 %v584, %v580
    %v793 = vpack.c.b16 %v585, %v581
    %v794 = vpack.c.b16 %v586, %v582
    %v795 = vpack.c.b16 %v587, %v583
    %v796 = vpack.c.b16 %v592, %v588
    %v797 = vpack.c.b16 %v593, %v589
    %v798 = vpack.c.b16 %v594, %v590
    %v799 = vpack.c.b16 %v595, %v591
    %v800 = vpack.c.b16 %v600, %v596
    %v801 = vpack.c.b16 %v601, %v597
    %v802 = vpack.c.b16 %v602, %v598
    %v803 = vpack.c.b16 %v603, %v599
    %v804 = vpack.c.b16 %v608, %v604
    %v805 = vpack.c.b16 %v609, %v605
    %v806 = vpack.c.b16 %v610, %v606
    %v807 = vpack.c.b16 %v611, %v607
    %v808 = vpack.c.b16 %v616, %v612
    %v809 = vpack.c.b16 %v617, %v613
    %v810 = vpack.c.b16 %v618, %v614
    %v811 = vpack.c.b16 %v619, %v615
    %v812 = vpack.c.b16 %v624, %v620
    %v813 = vpack.c.b16 %v625, %v621
    %v814 = vpack.c.b16 %v626, %v622
    %v815 = vpack.c.b16 %v627, %v623
    %v816 = vpack.c.b16 %v632, %v628
    %v817 = vpack.c.b16 %v633, %v629
    %v818 = vpack.c.b16 %v634, %v630
    %v819 = vpack.c.b16 %v635, %v631
    %v820 = vpack.c.b16 %v640, %v636
    %v821 = vpack.c.b16 %v641, %v637
    %v822 = vpack.c.b16 %v642, %v638
    %v823 = vpack.c.b16 %v643, %v639
    %v824 = vpack.c.b16 %v648, %v644
    %v825 = vpack.c.b16 %v649, %v645
    %v826 = vpack.c.b16 %v650, %v646
    %v827 = vpack.c.b16 %v651, %v647
    %v828 = vpack.c.b16 %v656, %v652
    %v829 = vpack.c.b16 %v657, %v653
    %v830 = vpack.c.b16 %v658, %v654
    %v831 = vpack.c.b16 %v659, %v655
    %v832 = vpack.c.b16 %v664, %v660
    %v833 = vpack.c.b16 %v665, %v661
    %v834 = vpack.c.b16 %v666, %v662
    %v835 = vpack.c.b16 %v667, %v663
    %v836 = vpack.c.b16 %v672, %v668
    %v837 = vpack.c.b16 %v673, %v669
    %v838 = vpack.c.b16 %v674, %v670
    %v839 = vpack.c.b16 %v675, %v671
    %v840 = vpack.c.b16 %v680, %v676
    %v841 = vpack.c.b16 %v681, %v677
    %v842 = vpack.c.b16 %v682, %v678
    %v843 = vpack.c.b16 %v683, %v679
    %v844 = vpack.c.b16 %v688, %v684
    %v845 = vpack.c.b16 %v689, %v685
    %v846 = vpack.c.b16 %v690, %v686
    %v847 = vpack.c.b16 %v691, %v687
    %v848 = vpack.c.b16 %v696, %v692
    %v849 = vpack.c.b16 %v697, %v693
    %v850 = vpack.c.b16 %v698, %v694
    %v851 = vpack.c.b16 %v699, %v695
    %v852 = vpack.c.b16 %v704, %v700
    %v853 = vpack.c.b16 %v705, %v701
    %v854 = vpack.c.b16 %v706, %v702
    %v855 = vpack.c.b16 %v707, %v703
    %v856 = vpack.c.b16 %v712, %v708
    %v857 = vpack.c.b16 %v713, %v709
    %v858 = vpack.c.b16 %v714, %v710
    %v859 = vpack.c.b16 %v715, %v711
    %v860 = vpack.c.b16 %v720, %v716
    %v861 = vpack.c.b16 %v721, %v717
    %v862 = vpack.c.b16 %v722, %v718
    %v863 = vpack.c.b16 %v723, %v719
    %v864 = vpack.c.b16 %v728, %v724
    %v865 = vpack.c.b16 %v729, %v725
    %v866 = vpack.c.b16 %v730, %v726
    %v867 = vpack.c.b16 %v731, %v727
    %v868 = vpack.c.b16 %v736, %v732
    %v869 = vpack.c.b16 %v737, %v733
    %v870 = vpack.c.b16 %v738, %v734
    %v871 = vpack.c.b16 %v739, %v735
    %v872 = vpack.c.b16 %v744, %v740
    %v873 = vpack.c.b16 %v745, %v741
    %v874 = vpack.c.b16 %v746, %v742
    %v875 = vpack.c.b16 %v747, %v743
    %1004 = vmatprep.subr.bf16.mxu0 %v777
    %1005 = vmatpush1.bf16.msra.mxu0 %v776
    %1006 = vmatprep.subr.bf16.mxu0 %v773
    %1007 = vmatpush1.bf16.msra.mxu0 %v772
    %1008 = vmatprep.subr.bf16.mxu0 %v769
    %1009 = vmatpush1.bf16.msra.mxu0 %v768
    %1010 = vmatprep.subr.bf16.mxu0 %v765
    %1011 = vmatpush1.bf16.msra.mxu0 %v764
    %1012 = vmatprep.subr.bf16.mxu0 %v761
    %1013 = vmatpush1.bf16.msra.mxu0 %v760
    %1014 = vmatprep.subr.bf16.mxu0 %v757
    %1015 = vmatpush1.bf16.msra.mxu0 %v756
    %1016 = vmatprep.subr.bf16.mxu0 %v753
    %1017 = vmatpush1.bf16.msra.mxu0 %v752
    %1018 = vmatprep.subr.bf16.mxu0 %v749
    %1019 = vmatpush1.bf16.msra.mxu0 %v748
    %1020 = vmatprep.subr.bf16.mxu0 %v809
    %1021 = vmatpush2.bf16.msra.mxu0 %v808
    %1022 = vmatprep.subr.bf16.mxu0 %v805
    %1023 = vmatpush2.bf16.msra.mxu0 %v804
    %1024 = vmatprep.subr.bf16.mxu0 %v801
    %1025 = vmatpush2.bf16.msra.mxu0 %v800
    %1026 = vmatprep.subr.bf16.mxu0 %v797
    %1027 = vmatpush2.bf16.msra.mxu0 %v796
    %1028 = vmatprep.subr.bf16.mxu0 %v793
    %1029 = vmatpush2.bf16.msra.mxu0 %v792
    %1030 = vmatprep.subr.bf16.mxu0 %v789
    %1031 = vmatpush2.bf16.msra.mxu0 %v788
    %1032 = vmatprep.subr.bf16.mxu0 %v785
    %1033 = vmatpush2.bf16.msra.mxu0 %v784
    %1034 = vmatprep.subr.bf16.mxu0 %v781
    %1035 = vmatpush2.bf16.msra.mxu0 %v780
    %1036 = vmatprep.mubr.bf16.mxu0 %v210
    %1037 = vmatmul.mubr.bf16.gmra.mxu0 %v209
    %v1038 = vpop.f32.mrf.mxu0
    %v1039 = vadd.f32 %v347, %v1038
    %v1040 = vpop.f32.mrf.mxu0
    %v1041 = vadd.f32 %v351, %v1040
    %v1042 = vpop.f32.mrf.mxu0
    %v1043 = vadd.f32 %v347, %v1042
    %v1044 = vpop.f32.mrf.mxu0
    %v1045 = vadd.f32 %v351, %v1044
    %1046 = vdwg.mxu0
    %1047 = vmatprep.subr.bf16.mxu0 %v841
    %1048 = vmatpush1.bf16.msra.mxu0 %v840
    %1049 = vmatprep.subr.bf16.mxu0 %v837
    %1050 = vmatpush1.bf16.msra.mxu0 %v836
    %1051 = vmatprep.subr.bf16.mxu0 %v833
    %1052 = vmatpush1.bf16.msra.mxu0 %v832
    %1053 = vmatprep.subr.bf16.mxu0 %v829
    %1054 = vmatpush1.bf16.msra.mxu0 %v828
    %1055 = vmatprep.subr.bf16.mxu0 %v825
    %1056 = vmatpush1.bf16.msra.mxu0 %v824
    %1057 = vmatprep.subr.bf16.mxu0 %v821
    %1058 = vmatpush1.bf16.msra.mxu0 %v820
    %1059 = vmatprep.subr.bf16.mxu0 %v817
    %1060 = vmatpush1.bf16.msra.mxu0 %v816
    %1061 = vmatprep.subr.bf16.mxu0 %v813
    %1062 = vmatpush1.bf16.msra.mxu0 %v812
    %1063 = vmatprep.subr.bf16.mxu0 %v873
    %1064 = vmatpush2.bf16.msra.mxu0 %v872
    %1065 = vmatprep.subr.bf16.mxu0 %v869
    %1066 = vmatpush2.bf16.msra.mxu0 %v868
    %1067 = vmatprep.subr.bf16.mxu0 %v865
    %1068 = vmatpush2.bf16.msra.mxu0 %v864
    %1069 = vmatprep.subr.bf16.mxu0 %v861
    %1070 = vmatpush2.bf16.msra.mxu0 %v860
    %1071 = vmatprep.subr.bf16.mxu0 %v857
    %1072 = vmatpush2.bf16.msra.mxu0 %v856
    %1073 = vmatprep.subr.bf16.mxu0 %v853
    %1074 = vmatpush2.bf16.msra.mxu0 %v852
    %1075 = vmatprep.subr.bf16.mxu0 %v849
    %1076 = vmatpush2.bf16.msra.mxu0 %v848
    %1077 = vmatprep.subr.bf16.mxu0 %v845
    %1078 = vmatpush2.bf16.msra.mxu0 %v844
    %1079 = vmatprep.mubr.bf16.mxu0 %v212
    %1080 = vmatmul.mubr.bf16.gmra.mxu0 %v211
    %v1081 = vpop.f32.mrf.mxu0
    %v1082 = vadd.f32 %v1039, %v1081
    %v1083 = vpop.f32.mrf.mxu0
    %v1084 = vadd.f32 %v1041, %v1083
    %v1085 = vpop.f32.mrf.mxu0
    %v1086 = vadd.f32 %v1043, %v1085
    %v1087 = vpop.f32.mrf.mxu0
    %v1088 = vadd.f32 %v1045, %v1087
    %1089 = vdwg.mxu0
    %1090 = vmatprep.subr.bf16.mxu0 %v779
    %1091 = vmatpush1.bf16.msra.mxu0 %v778
    %1092 = vmatprep.subr.bf16.mxu0 %v775
    %1093 = vmatpush1.bf16.msra.mxu0 %v774
    %1094 = vmatprep.subr.bf16.mxu0 %v771
    %1095 = vmatpush1.bf16.msra.mxu0 %v770
    %1096 = vmatprep.subr.bf16.mxu0 %v767
    %1097 = vmatpush1.bf16.msra.mxu0 %v766
    %1098 = vmatprep.subr.bf16.mxu0 %v763
    %1099 = vmatpush1.bf16.msra.mxu0 %v762
    %1100 = vmatprep.subr.bf16.mxu0 %v759
    %1101 = vmatpush1.bf16.msra.mxu0 %v758
    %1102 = vmatprep.subr.bf16.mxu0 %v755
    %1103 = vmatpush1.bf16.msra.mxu0 %v754
    %1104 = vmatprep.subr.bf16.mxu0 %v751
    %1105 = vmatpush1.bf16.msra.mxu0 %v750
    %1106 = vmatprep.subr.bf16.mxu0 %v811
    %1107 = vmatpush2.bf16.msra.mxu0 %v810
    %1108 = vmatprep.subr.bf16.mxu0 %v807
    %1109 = vmatpush2.bf16.msra.mxu0 %v806
    %1110 = vmatprep.subr.bf16.mxu0 %v803
    %1111 = vmatpush2.bf16.msra.mxu0 %v802
    %1112 = vmatprep.subr.bf16.mxu0 %v799
    %1113 = vmatpush2.bf16.msra.mxu0 %v798
    %1114 = vmatprep.subr.bf16.mxu0 %v795
    %1115 = vmatpush2.bf16.msra.mxu0 %v794
    %1116 = vmatprep.subr.bf16.mxu0 %v791
    %1117 = vmatpush2.bf16.msra.mxu0 %v790
    %1118 = vmatprep.subr.bf16.mxu0 %v787
    %1119 = vmatpush2.bf16.msra.mxu0 %v786
    %1120 = vmatprep.subr.bf16.mxu0 %v783
    %1121 = vmatpush2.bf16.msra.mxu0 %v782
    %1122 = vmatprep.mubr.bf16.mxu0 %v210
    %1123 = vmatmul.mubr.bf16.gmra.mxu0 %v209
    %v1124 = vpop.f32.mrf.mxu0
    %v1125 = vadd.f32 %v355, %v1124
    %v1126 = vpop.f32.mrf.mxu0
    %v1127 = vadd.f32 %v359, %v1126
    %v1128 = vpop.f32.mrf.mxu0
    %v1129 = vadd.f32 %v355, %v1128
    %v1130 = vpop.f32.mrf.mxu0
    %v1131 = vadd.f32 %v359, %v1130
    %1132 = vdwg.mxu0
    %1133 = vmatprep.subr.bf16.mxu0 %v843
    %1134 = vmatpush1.bf16.msra.mxu0 %v842
    %1135 = vmatprep.subr.bf16.mxu0 %v839
    %1136 = vmatpush1.bf16.msra.mxu0 %v838
    %1137 = vmatprep.subr.bf16.mxu0 %v835
    %1138 = vmatpush1.bf16.msra.mxu0 %v834
    %1139 = vmatprep.subr.bf16.mxu0 %v831
    %1140 = vmatpush1.bf16.msra.mxu0 %v830
    %1141 = vmatprep.subr.bf16.mxu0 %v827
    %1142 = vmatpush1.bf16.msra.mxu0 %v826
    %1143 = vmatprep.subr.bf16.mxu0 %v823
    %1144 = vmatpush1.bf16.msra.mxu0 %v822
    %1145 = vmatprep.subr.bf16.mxu0 %v819
    %1146 = vmatpush1.bf16.msra.mxu0 %v818
    %1147 = vmatprep.subr.bf16.mxu0 %v815
    %1148 = vmatpush1.bf16.msra.mxu0 %v814
    %1149 = vmatprep.subr.bf16.mxu0 %v875
    %1150 = vmatpush2.bf16.msra.mxu0 %v874
    %1151 = vmatprep.subr.bf16.mxu0 %v871
    %1152 = vmatpush2.bf16.msra.mxu0 %v870
    %1153 = vmatprep.subr.bf16.mxu0 %v867
    %1154 = vmatpush2.bf16.msra.mxu0 %v866
    %1155 = vmatprep.subr.bf16.mxu0 %v863
    %1156 = vmatpush2.bf16.msra.mxu0 %v862
    %1157 = vmatprep.subr.bf16.mxu0 %v859
    %1158 = vmatpush2.bf16.msra.mxu0 %v858
    %1159 = vmatprep.subr.bf16.mxu0 %v855
    %1160 = vmatpush2.bf16.msra.mxu0 %v854
    %1161 = vmatprep.subr.bf16.mxu0 %v851
    %1162 = vmatpush2.bf16.msra.mxu0 %v850
    %1163 = vmatprep.subr.bf16.mxu0 %v847
    %1164 = vmatpush2.bf16.msra.mxu0 %v846
    %1165 = vmatprep.mubr.bf16.mxu0 %v212
    %1166 = vmatmul.mubr.bf16.gmra.mxu0 %v211
    %v1167 = vpop.f32.mrf.mxu0
    %v1168 = vadd.f32 %v1125, %v1167
    %v1169 = vpop.f32.mrf.mxu0
    %v1170 = vadd.f32 %v1127, %v1169
    %v1171 = vpop.f32.mrf.mxu0
    %v1172 = vadd.f32 %v1129, %v1171
    %v1173 = vpop.f32.mrf.mxu0
    %v1174 = vadd.f32 %v1131, %v1173
    %1175 = vdwg.mxu0
    %v1176 = vmax.f32 %v1082, 0.0
    %v1177 = vmax.f32 %v1084, 0.0
    %v1178 = vmax.f32 %v1168, 0.0
    %v1179 = vmax.f32 %v1170, 0.0
    %v1180 = vmax.f32 %v1086, 0.0
    %v1181 = vmax.f32 %v1088, 0.0
    %v1182 = vmax.f32 %v1172, 0.0
    %v1183 = vmax.f32 %v1174, 0.0
    %v1184 = vpack.c.bf16 %v1180, %v1176
    %v1185 = vpack.c.bf16 %v1181, %v1177
    %v1186 = vpack.c.bf16 %v1182, %v1178
    %v1187 = vpack.c.bf16 %v1183, %v1179
    %v1188 = vld [vmem:[#allocation5] sm:$0xf]
    %v1189 = vld [vmem:[#allocation5 + $0x4] sm:$0xf]
    %v1190 = vld [vmem:[#allocation5 + $0x8] sm:$0xf]
    %v1191 = vld [vmem:[#allocation5 + $0xc] sm:$0xf]
    %v1192 = vld [vmem:[#allocation5 + $0x10] sm:$0xf]
    %v1193 = vld [vmem:[#allocation5 + $0x14] sm:$0xf]
    %v1194 = vld [vmem:[#allocation5 + $0x18] sm:$0xf]
    %v1195 = vld [vmem:[#allocation5 + $0x1c] sm:$0xf]
    %v1196 = vld [vmem:[#allocation5 + $0x20] sm:$0xf]
    %v1197 = vld [vmem:[#allocation5 + $0x24] sm:$0xf]
    %v1198 = vld [vmem:[#allocation5 + $0x28] sm:$0xf]
    %v1199 = vld [vmem:[#allocation5 + $0x2c] sm:$0xf]
    %v1200 = vld [vmem:[#allocation5 + $0x30] sm:$0xf]
    %v1201 = vld [vmem:[#allocation5 + $0x34] sm:$0xf]
    %v1202 = vld [vmem:[#allocation5 + $0x38] sm:$0xf]
    %v1203 = vld [vmem:[#allocation5 + $0x3c] sm:$0xf]
    %v1204 = vld [vmem:[#allocation5 + $0x40] sm:$0xf]
    %v1205 = vld [vmem:[#allocation5 + $0x44] sm:$0xf]
    %v1206 = vld [vmem:[#allocation5 + $0x48] sm:$0xf]
    %v1207 = vld [vmem:[#allocation5 + $0x4c] sm:$0xf]
    %v1208 = vld [vmem:[#allocation5 + $0x50] sm:$0xf]
    %v1209 = vld [vmem:[#allocation5 + $0x54] sm:$0xf]
    %v1210 = vld [vmem:[#allocation5 + $0x58] sm:$0xf]
    %v1211 = vld [vmem:[#allocation5 + $0x5c] sm:$0xf]
    %v1212 = vld [vmem:[#allocation5 + $0x60] sm:$0xf]
    %v1213 = vld [vmem:[#allocation5 + $0x64] sm:$0xf]
    %v1214 = vld [vmem:[#allocation5 + $0x68] sm:$0xf]
    %v1215 = vld [vmem:[#allocation5 + $0x6c] sm:$0xf]
    %v1216 = vld [vmem:[#allocation5 + $0x70] sm:$0xf]
    %v1217 = vld [vmem:[#allocation5 + $0x74] sm:$0xf]
    %v1218 = vld [vmem:[#allocation5 + $0x78] sm:$0xf]
    %v1219 = vld [vmem:[#allocation5 + $0x7c] sm:$0xf]
    %v1220 = vld [vmem:[#allocation5 + $0x80] sm:$0xf]
    %v1221 = vld [vmem:[#allocation5 + $0x84] sm:$0xf]
    %v1222 = vld [vmem:[#allocation5 + $0x88] sm:$0xf]
    %v1223 = vld [vmem:[#allocation5 + $0x8c] sm:$0xf]
    %v1224 = vld [vmem:[#allocation5 + $0x90] sm:$0xf]
    %v1225 = vld [vmem:[#allocation5 + $0x94] sm:$0xf]
    %v1226 = vld [vmem:[#allocation5 + $0x98] sm:$0xf]
    %v1227 = vld [vmem:[#allocation5 + $0x9c] sm:$0xf]
    %v1228 = vld [vmem:[#allocation5 + $0xa0] sm:$0xf]
    %v1229 = vld [vmem:[#allocation5 + $0xa4] sm:$0xf]
    %v1230 = vld [vmem:[#allocation5 + $0xa8] sm:$0xf]
    %v1231 = vld [vmem:[#allocation5 + $0xac] sm:$0xf]
    %v1232 = vld [vmem:[#allocation5 + $0xb0] sm:$0xf]
    %v1233 = vld [vmem:[#allocation5 + $0xb4] sm:$0xf]
    %v1234 = vld [vmem:[#allocation5 + $0xb8] sm:$0xf]
    %v1235 = vld [vmem:[#allocation5 + $0xbc] sm:$0xf]
    %v1236 = vld [vmem:[#allocation5 + $0xc0] sm:$0xf]
    %v1237 = vld [vmem:[#allocation5 + $0xc4] sm:$0xf]
    %v1238 = vld [vmem:[#allocation5 + $0xc8] sm:$0xf]
    %v1239 = vld [vmem:[#allocation5 + $0xcc] sm:$0xf]
    %v1240 = vld [vmem:[#allocation5 + $0xd0] sm:$0xf]
    %v1241 = vld [vmem:[#allocation5 + $0xd4] sm:$0xf]
    %v1242 = vld [vmem:[#allocation5 + $0xd8] sm:$0xf]
    %v1243 = vld [vmem:[#allocation5 + $0xdc] sm:$0xf]
    %v1244 = vld [vmem:[#allocation5 + $0xe0] sm:$0xf]
    %v1245 = vld [vmem:[#allocation5 + $0xe4] sm:$0xf]
    %v1246 = vld [vmem:[#allocation5 + $0xe8] sm:$0xf]
    %v1247 = vld [vmem:[#allocation5 + $0xec] sm:$0xf]
    %v1248 = vld [vmem:[#allocation5 + $0xf0] sm:$0xf]
    %v1249 = vld [vmem:[#allocation5 + $0xf4] sm:$0xf]
    %v1250 = vld [vmem:[#allocation5 + $0xf8] sm:$0xf]
    %v1251 = vld [vmem:[#allocation5 + $0xfc] sm:$0xf]
    %v1252 = vld [vmem:[#allocation7 + $0x2] sm:$0x1]
    %v1253 = vlaneseq
    %v1254 = vshrl.u32 %v1253, 7
    %v1255 = vsub.s32 0, %v1254
    %v1256 = vrot.slane %v1252, %v1255
    %v1321 = vunpack.c.l.b16 %v1188
    %v1322 = vunpack.c.l.b16 %v1189
    %v1323 = vunpack.c.l.b16 %v1190
    %v1324 = vunpack.c.l.b16 %v1191
    %v1325 = vunpack.c.l.b16 %v1192
    %v1326 = vunpack.c.l.b16 %v1193
    %v1327 = vunpack.c.l.b16 %v1194
    %v1328 = vunpack.c.l.b16 %v1195
    %v1329 = vunpack.c.l.b16 %v1196
    %v1330 = vunpack.c.l.b16 %v1197
    %v1331 = vunpack.c.l.b16 %v1198
    %v1332 = vunpack.c.l.b16 %v1199
    %v1333 = vunpack.c.l.b16 %v1200
    %v1334 = vunpack.c.l.b16 %v1201
    %v1335 = vunpack.c.l.b16 %v1202
    %v1336 = vunpack.c.l.b16 %v1203
    %v1337 = vunpack.c.l.b16 %v1204
    %v1338 = vunpack.c.l.b16 %v1205
    %v1339 = vunpack.c.l.b16 %v1206
    %v1340 = vunpack.c.l.b16 %v1207
    %v1341 = vunpack.c.l.b16 %v1208
    %v1342 = vunpack.c.l.b16 %v1209
    %v1343 = vunpack.c.l.b16 %v1210
    %v1344 = vunpack.c.l.b16 %v1211
    %v1345 = vunpack.c.l.b16 %v1212
    %v1346 = vunpack.c.l.b16 %v1213
    %v1347 = vunpack.c.l.b16 %v1214
    %v1348 = vunpack.c.l.b16 %v1215
    %v1349 = vunpack.c.l.b16 %v1216
    %v1350 = vunpack.c.l.b16 %v1217
    %v1351 = vunpack.c.l.b16 %v1218
    %v1352 = vunpack.c.l.b16 %v1219
    %v1353 = vunpack.c.l.b16 %v1220
    %v1354 = vunpack.c.l.b16 %v1221
    %v1355 = vunpack.c.l.b16 %v1222
    %v1356 = vunpack.c.l.b16 %v1223
    %v1357 = vunpack.c.l.b16 %v1224
    %v1358 = vunpack.c.l.b16 %v1225
    %v1359 = vunpack.c.l.b16 %v1226
    %v1360 = vunpack.c.l.b16 %v1227
    %v1361 = vunpack.c.l.b16 %v1228
    %v1362 = vunpack.c.l.b16 %v1229
    %v1363 = vunpack.c.l.b16 %v1230
    %v1364 = vunpack.c.l.b16 %v1231
    %v1365 = vunpack.c.l.b16 %v1232
    %v1366 = vunpack.c.l.b16 %v1233
    %v1367 = vunpack.c.l.b16 %v1234
    %v1368 = vunpack.c.l.b16 %v1235
    %v1369 = vunpack.c.l.b16 %v1236
    %v1370 = vunpack.c.l.b16 %v1237
    %v1371 = vunpack.c.l.b16 %v1238
    %v1372 = vunpack.c.l.b16 %v1239
    %v1373 = vunpack.c.l.b16 %v1240
    %v1374 = vunpack.c.l.b16 %v1241
    %v1375 = vunpack.c.l.b16 %v1242
    %v1376 = vunpack.c.l.b16 %v1243
    %v1377 = vunpack.c.l.b16 %v1244
    %v1378 = vunpack.c.l.b16 %v1245
    %v1379 = vunpack.c.l.b16 %v1246
    %v1380 = vunpack.c.l.b16 %v1247
    %v1381 = vunpack.c.l.b16 %v1248
    %v1382 = vunpack.c.l.b16 %v1249
    %v1383 = vunpack.c.l.b16 %v1250
    %v1384 = vunpack.c.l.b16 %v1251
    %v1385 = vpack.c.b16 %v1322, %v1321
    %v1386 = vpack.c.b16 %v1324, %v1323
    %v1387 = vpack.c.b16 %v1326, %v1325
    %v1388 = vpack.c.b16 %v1328, %v1327
    %v1389 = vpack.c.b16 %v1330, %v1329
    %v1390 = vpack.c.b16 %v1332, %v1331
    %v1391 = vpack.c.b16 %v1334, %v1333
    %v1392 = vpack.c.b16 %v1336, %v1335
    %v1393 = vpack.c.b16 %v1338, %v1337
    %v1394 = vpack.c.b16 %v1340, %v1339
    %v1395 = vpack.c.b16 %v1342, %v1341
    %v1396 = vpack.c.b16 %v1344, %v1343
    %v1397 = vpack.c.b16 %v1346, %v1345
    %v1398 = vpack.c.b16 %v1348, %v1347
    %v1399 = vpack.c.b16 %v1350, %v1349
    %v1400 = vpack.c.b16 %v1352, %v1351
    %v1401 = vpack.c.b16 %v1354, %v1353
    %v1402 = vpack.c.b16 %v1356, %v1355
    %v1403 = vpack.c.b16 %v1358, %v1357
    %v1404 = vpack.c.b16 %v1360, %v1359
    %v1405 = vpack.c.b16 %v1362, %v1361
    %v1406 = vpack.c.b16 %v1364, %v1363
    %v1407 = vpack.c.b16 %v1366, %v1365
    %v1408 = vpack.c.b16 %v1368, %v1367
    %v1409 = vpack.c.b16 %v1370, %v1369
    %v1410 = vpack.c.b16 %v1372, %v1371
    %v1411 = vpack.c.b16 %v1374, %v1373
    %v1412 = vpack.c.b16 %v1376, %v1375
    %v1413 = vpack.c.b16 %v1378, %v1377
    %v1414 = vpack.c.b16 %v1380, %v1379
    %v1415 = vpack.c.b16 %v1382, %v1381
    %v1416 = vpack.c.b16 %v1384, %v1383
    %1449 = vmatprep.subr.bf16.mxu0 0
    %1450 = vmatpush1.bf16.msra.mxu0 %v1392
    %1451 = vmatprep.subr.bf16.mxu0 0
    %1452 = vmatpush1.bf16.msra.mxu0 %v1391
    %1453 = vmatprep.subr.bf16.mxu0 0
    %1454 = vmatpush1.bf16.msra.mxu0 %v1390
    %1455 = vmatprep.subr.bf16.mxu0 0
    %1456 = vmatpush1.bf16.msra.mxu0 %v1389
    %1457 = vmatprep.subr.bf16.mxu0 0
    %1458 = vmatpush1.bf16.msra.mxu0 %v1388
    %1459 = vmatprep.subr.bf16.mxu0 0
    %1460 = vmatpush1.bf16.msra.mxu0 %v1387
    %1461 = vmatprep.subr.bf16.mxu0 0
    %1462 = vmatpush1.bf16.msra.mxu0 %v1386
    %1463 = vmatprep.subr.bf16.mxu0 0
    %1464 = vmatpush1.bf16.msra.mxu0 %v1385
    %1465 = vmatprep.subr.bf16.mxu0 0
    %1466 = vmatpush2.bf16.msra.mxu0 %v1400
    %1467 = vmatprep.subr.bf16.mxu0 0
    %1468 = vmatpush2.bf16.msra.mxu0 %v1399
    %1469 = vmatprep.subr.bf16.mxu0 0
    %1470 = vmatpush2.bf16.msra.mxu0 %v1398
    %1471 = vmatprep.subr.bf16.mxu0 0
    %1472 = vmatpush2.bf16.msra.mxu0 %v1397
    %1473 = vmatprep.subr.bf16.mxu0 0
    %1474 = vmatpush2.bf16.msra.mxu0 %v1396
    %1475 = vmatprep.subr.bf16.mxu0 0
    %1476 = vmatpush2.bf16.msra.mxu0 %v1395
    %1477 = vmatprep.subr.bf16.mxu0 0
    %1478 = vmatpush2.bf16.msra.mxu0 %v1394
    %1479 = vmatprep.subr.bf16.mxu0 0
    %1480 = vmatpush2.bf16.msra.mxu0 %v1393
    %1481 = vmatprep.mubr.bf16.mxu0 %v1185
    %1482 = vmatmul.mubr.bf16.gmra.mxu0 %v1184
    %v1483 = vpop.f32.mrf.mxu0
    %v1484 = vadd.f32 %v1256, %v1483
    %v1485 = vpop.f32.mrf.mxu0
    %v1486 = vpop.f32.mrf.mxu0
    %v1487 = vadd.f32 %v1256, %v1486
    %v1488 = vpop.f32.mrf.mxu0
    %1489 = vdwg.mxu0
    %1490 = vmatprep.subr.bf16.mxu0 0
    %1491 = vmatpush1.bf16.msra.mxu0 %v1408
    %1492 = vmatprep.subr.bf16.mxu0 0
    %1493 = vmatpush1.bf16.msra.mxu0 %v1407
    %1494 = vmatprep.subr.bf16.mxu0 0
    %1495 = vmatpush1.bf16.msra.mxu0 %v1406
    %1496 = vmatprep.subr.bf16.mxu0 0
    %1497 = vmatpush1.bf16.msra.mxu0 %v1405
    %1498 = vmatprep.subr.bf16.mxu0 0
    %1499 = vmatpush1.bf16.msra.mxu0 %v1404
    %1500 = vmatprep.subr.bf16.mxu0 0
    %1501 = vmatpush1.bf16.msra.mxu0 %v1403
    %1502 = vmatprep.subr.bf16.mxu0 0
    %1503 = vmatpush1.bf16.msra.mxu0 %v1402
    %1504 = vmatprep.subr.bf16.mxu0 0
    %1505 = vmatpush1.bf16.msra.mxu0 %v1401
    %1506 = vmatprep.subr.bf16.mxu0 0
    %1507 = vmatpush2.bf16.msra.mxu0 %v1416
    %1508 = vmatprep.subr.bf16.mxu0 0
    %1509 = vmatpush2.bf16.msra.mxu0 %v1415
    %1510 = vmatprep.subr.bf16.mxu0 0
    %1511 = vmatpush2.bf16.msra.mxu0 %v1414
    %1512 = vmatprep.subr.bf16.mxu0 0
    %1513 = vmatpush2.bf16.msra.mxu0 %v1413
    %1514 = vmatprep.subr.bf16.mxu0 0
    %1515 = vmatpush2.bf16.msra.mxu0 %v1412
    %1516 = vmatprep.subr.bf16.mxu0 0
    %1517 = vmatpush2.bf16.msra.mxu0 %v1411
    %1518 = vmatprep.subr.bf16.mxu0 0
    %1519 = vmatpush2.bf16.msra.mxu0 %v1410
    %1520 = vmatprep.subr.bf16.mxu0 0
    %1521 = vmatpush2.bf16.msra.mxu0 %v1409
    %1522 = vmatprep.mubr.bf16.mxu0 %v1187
    %1523 = vmatmul.mubr.bf16.gmra.mxu0 %v1186
    %v1524 = vpop.f32.mrf.mxu0
    %v1525 = vadd.f32 %v1484, %v1524
    %v1526 = vpop.f32.mrf.mxu0
    %v1527 = vpop.f32.mrf.mxu0
    %v1528 = vadd.f32 %v1487, %v1527
    %v1529 = vpop.f32.mrf.mxu0
    %1530 = vdwg.mxu0
    %1531 = vst [vmem:[#allocation8] sm:$0xff] %v1525
    %1532 = vst [vmem:[#allocation8 + $0x8] sm:$0xff] %v1528
    // Predicated region
    $region34: #{tpu_custom_call.1} parent=1 // pred_check
      _
    $region35: #{tpu_custom_call.1} parent=1 // pred_check_branch
      %1534 = sbr.rel (0) target = $region37
    $region36: #{tpu_custom_call.1} parent=1 // pred_region
      %s1536 = ssub.s32 256, 256
      %1537 = vsyncadd [#allocation4], %s1536
      %s1538 = sshll.u32 [#allocation8], 4
      %s1539 = int_to_ptr.vmem [resolvable:$true] %s1538
      %1544 = dma.vmem_to_hbm [thread:$0]  %s1539, 256, %s5, [#allocation4], 128, 128, 8
    $region37: #{tpu_custom_call.1} parent=1 // pred_fallthru
      _
    // Predicated region
    $region38: #{tpu_custom_call.1} parent=1 // pred_check
      _
    $region39: #{tpu_custom_call.1} parent=1 // pred_check_branch
      %1546 = sbr.rel (0) target = $region41
    $region40: #{tpu_custom_call.1} parent=1 // pred_region
      %1547 = dma.done [#allocation4], 256
    $region41: #{tpu_custom_call.1} parent=1 // pred_fallthru
      _
    %1548 = vsyncpa [#allocation3], 1
    %1549 = vsyncpa [#allocation6], 1
    %1550 = vsyncpa [#allocation4], 1

</llo_original>
